<compile_context>
chip_gen: v7x
topology: tpu7x:2x2x1
jax: 0.10.0
libtpu: 0.0.40
codegen_flags: <defaults>
</compile_context>

<pallas_src>
import functools

import jax
import jax.numpy as jnp
from jax.experimental import pallas as pl
from jax.experimental.pallas import tpu as pltpu

_OUT_SUB = 8
_OUT_LANE = 128


def _distill_kl_kernel(ys_ref, yt_ref, out_ref, *, inv_t, scale, true_b, tile_b):
    # ys_ref / yt_ref: (tile_b, C) VMEM tiles.  out_ref: (1, 8, 128) VMEM block
    # that carries this tile's (already scaled) partial KL sum, broadcast.
    i = pl.program_id(0)

    ys = ys_ref[...].astype(jnp.float32) * inv_t
    yt = yt_ref[...].astype(jnp.float32) * inv_t

    # Student: only the per-row log-partition is needed.
    ys_shift = ys - jnp.max(ys, axis=1, keepdims=True)
    log_z_s = jnp.log(jnp.sum(jnp.exp(ys_shift), axis=1, keepdims=True))

    # Teacher.
    yt_shift = yt - jnp.max(yt, axis=1, keepdims=True)
    exp_t = jnp.exp(yt_shift)
    z_t = jnp.sum(exp_t, axis=1, keepdims=True)
    log_z_t = jnp.log(z_t)

    # Per-row KL, using sum_c p_t == 1 to avoid materializing p_t / log_p_t:
    #   sum_c p_t * (log_p_t - log_p_s)
    #     = (sum_c exp_t * (yt_shift - ys_shift)) / z_t - (log_z_t - log_z_s)
    num = jnp.sum(exp_t * (yt_shift - ys_shift), axis=1, keepdims=True)  # (tb, 1)
    kl_row = num / z_t - (log_z_t - log_z_s)                             # (tb, 1)

    # Select (not multiply!) away rows of the final partial block that lie
    # beyond the true batch: their VMEM contents are undefined and may have
    # produced NaN/inf above, but the select confines that to the dead branch.
    row = i * tile_b + jax.lax.broadcasted_iota(jnp.int32, kl_row.shape, 0)
    kl_row = jnp.where(row < true_b, kl_row, 0.0)

    partial = jnp.sum(kl_row) * scale  # scale = T^2 / true_B
    out_ref[...] = jnp.full(out_ref.shape, partial, dtype=jnp.float32)


def _vmem_capacity_bytes(default=64 * 1024 * 1024):
    """Per-core VMEM capacity; falls back to the smallest (v7x) if unknown."""
    try:
        info = pltpu.get_tpu_info()
        cap = getattr(info, "vmem_capacity_bytes", None)
        if cap:
            return int(cap)
    except Exception:
        pass
    return default


def distill_kl(y_s: jax.Array, y_t: jax.Array, T: float, *,
               block_b: int | None = None,
               vmem_budget_bytes: int | None = None) -> jax.Array:
    """Pallas TPU implementation of DistillKL.forward. y_s, y_t: (B, C) logits."""
    assert y_s.shape == y_t.shape and y_s.ndim == 2
    B, C = y_s.shape
    T = float(T)

    vmem_cap = _vmem_capacity_bytes()
    if vmem_budget_bytes is None:
        # ~1/4 of physical VMEM: 16 MiB on v7x (64 MiB), 32 MiB on v5e/v6e.
        vmem_budget_bytes = max(8 * 1024 * 1024, vmem_cap // 4)

    # Per batch-row VMEM cost:
    #   2 inputs x 2 pipeline buffers in the input dtype
    # + ~4 full-width f32 temporaries in the kernel working set
    #   (ys/yt upcasts, shifted copies, exp_t, product).
    itemsize = max(y_s.dtype.itemsize, y_t.dtype.itemsize)
    per_row_bytes = 2 * 2 * C * itemsize + 4 * C * 4

    if block_b is None:
        block_b = vmem_budget_bytes // per_row_bytes
        block_b = max(8, min(int(block_b), 8192))

    # Guarantee >= 2 grid tiles when there is enough batch, so the "parallel"
    # grid axis can actually be sharded across v7x's two TensorCores.
    if B >= 16:
        half_rounded = (((B + 1) // 2) + 7) // 8 * 8
        block_b = min(int(block_b), half_rounded)

    block_b = max(8, (int(block_b) // 8) * 8)        # sublane-aligned
    block_b = min(block_b, ((B + 7) // 8) * 8)       # don't exceed (rounded) batch

    num_tiles = pl.cdiv(B, block_b)                  # NO wrapper-side padding

    # Keep the compiler limit above the real allocation but well under physical
    # VMEM (important on v7x's 64 MiB per TC).
    vmem_limit_bytes = int(min(vmem_cap * 3 // 4,
                               max(vmem_budget_bytes * 3 // 2, 32 * 1024 * 1024)))

    kernel = functools.partial(
        _distill_kl_kernel,
        inv_t=1.0 / T, scale=(T * T) / B, true_b=B, tile_b=block_b)

    partials = pl.pallas_call(
        kernel,
        out_shape=jax.ShapeDtypeStruct((num_tiles, _OUT_SUB, _OUT_LANE), jnp.float32),
        grid_spec=pltpu.PrefetchScalarGridSpec(
            num_scalar_prefetch=0,
            grid=(num_tiles,),
            in_specs=[
                pl.BlockSpec((block_b, C), lambda i: (i, 0)),
                pl.BlockSpec((block_b, C), lambda i: (i, 0)),
            ],
            out_specs=pl.BlockSpec((1, _OUT_SUB, _OUT_LANE), lambda i: (i, 0, 0)),
        ),
        compiler_params=pltpu.CompilerParams(
            dimension_semantics=("parallel",),      # megacore-shardable on v7x
            vmem_limit_bytes=vmem_limit_bytes,
        ),
    )(y_s, y_t)

    # Trivial follow-up reduction over the per-tile partial sums.
    return jnp.sum(partials[:, 0, 0])


def _distill_kl_ref(y_s, y_t, T):
    # Pure-JAX reference for sanity checking.
    log_p_s = jax.nn.log_softmax(y_s / T, axis=1)
    p_t = jax.nn.softmax(y_t / T, axis=1)
    log_p_t = jax.nn.log_softmax(y_t / T, axis=1)
    kl = jnp.sum(p_t * (log_p_t - log_p_s))
    return kl * (T ** 2) / y_s.shape[0]


if __name__ == "__main__":
    T = 4.0
    key = jax.random.PRNGKey(0)

    # Case 1: small logits; B not a multiple of 8 -> single partial tile,
    # in-kernel row mask must neutralize the undefined tail rows.
    B, C = 12, 32
    k_s, k_t = jax.random.split(key)
    y_s = jax.random.normal(k_s, (B, C), dtype=jnp.float32)
    y_t = jax.random.normal(k_t, (B, C), dtype=jnp.float32)

    ref = jax.block_until_ready(_distill_kl_ref(y_s, y_t, T))
    loss = jax.block_until_ready(distill_kl(y_s, y_t, T))
    assert jnp.isfinite(loss)
    assert jnp.allclose(loss, ref, rtol=1e-5, atol=1e-5), (loss, ref)

    # Forced small tile -> multi-tile parallel grid with a partial last tile.
    loss_tiled = jax.block_until_ready(distill_kl(y_s, y_t, T, block_b=8))
    assert jnp.allclose(loss_tiled, ref, rtol=1e-5, atol=1e-5), (loss_tiled, ref)

    # Case 2: B >= 16 exercises the ">= 2 tiles" cap (both TCs get work) plus
    # an unpadded partial last block.
    B2, C2 = 20, 128
    k_s2, k_t2 = jax.random.split(jax.random.PRNGKey(1))
    y_s2 = jax.random.normal(k_s2, (B2, C2), dtype=jnp.float32)
    y_t2 = jax.random.normal(k_t2, (B2, C2), dtype=jnp.float32)

    ref2 = jax.block_until_ready(_distill_kl_ref(y_s2, y_t2, T))
    loss2 = jax.block_until_ready(distill_kl(y_s2, y_t2, T))
    assert jnp.allclose(loss2, ref2, rtol=1e-5, atol=1e-5), (loss2, ref2)

    print("KERNEL_OK")
</pallas_src>

<mosaic_0001>
module attributes {stable_mosaic.version = 11 : i64} {
  func.func @_distill_kl_kernel(%arg0: i32, %arg1: memref<16x32xf32, #tpu.memory_space<vmem>>, %arg2: memref<16x32xf32, #tpu.memory_space<vmem>>, %arg3: memref<1x8x128xf32, #tpu.memory_space<vmem>>) attributes {dimension_semantics = [#tpu.dimension_semantics<parallel>], iteration_bounds = array<i64: 1>, scalar_prefetch = 0 : i64, scratch_operands = 0 : i64, tpu.core_type = #tpu.core_type<tc>, window_params = [{transform_indices = @transform_0, window_bounds = array<i64: 16, 32>}, {transform_indices = @transform_1, window_bounds = array<i64: 16, 32>}, {transform_indices = @transform_2, window_bounds = array<i64: 1, 8, 128>}]} {
    %c0 = arith.constant 0 : index
    %c0_0 = arith.constant 0 : index
    %0 = vector.load %arg1[%c0, %c0_0] : memref<16x32xf32, #tpu.memory_space<vmem>>, vector<16x32xf32>
    %cst = arith.constant 2.500000e-01 : f32
    %1 = vector.broadcast %cst : f32 to vector<16x32xf32>
    %2 = arith.mulf %0, %1 : vector<16x32xf32>
    %c0_1 = arith.constant 0 : index
    %c0_2 = arith.constant 0 : index
    %3 = vector.load %arg2[%c0_1, %c0_2] : memref<16x32xf32, #tpu.memory_space<vmem>>, vector<16x32xf32>
    %cst_3 = arith.constant 2.500000e-01 : f32
    %4 = vector.broadcast %cst_3 : f32 to vector<16x32xf32>
    %5 = arith.mulf %3, %4 : vector<16x32xf32>
    %cst_4 = arith.constant dense<0xFF800000> : vector<16xf32>
    %6 = vector.multi_reduction <maximumf>, %2, %cst_4 [1] : vector<16x32xf32> to vector<16xf32>
    %7 = vector.shape_cast %6 : vector<16xf32> to vector<16x1xf32>
    %8 = vector.broadcast %7 : vector<16x1xf32> to vector<16x32xf32>
    %9 = arith.subf %2, %8 : vector<16x32xf32>
    %10 = math.exp %9 : vector<16x32xf32>
    %cst_5 = arith.constant dense<0.000000e+00> : vector<16xf32>
    %11 = vector.multi_reduction <add>, %10, %cst_5 [1] : vector<16x32xf32> to vector<16xf32>
    %12 = vector.shape_cast %11 : vector<16xf32> to vector<16x1xf32>
    %13 = math.log %12 : vector<16x1xf32>
    %cst_6 = arith.constant dense<0xFF800000> : vector<16xf32>
    %14 = vector.multi_reduction <maximumf>, %5, %cst_6 [1] : vector<16x32xf32> to vector<16xf32>
    %15 = vector.shape_cast %14 : vector<16xf32> to vector<16x1xf32>
    %16 = vector.broadcast %15 : vector<16x1xf32> to vector<16x32xf32>
    %17 = arith.subf %5, %16 : vector<16x32xf32>
    %18 = math.exp %17 : vector<16x32xf32>
    %cst_7 = arith.constant dense<0.000000e+00> : vector<16xf32>
    %19 = vector.multi_reduction <add>, %18, %cst_7 [1] : vector<16x32xf32> to vector<16xf32>
    %20 = vector.shape_cast %19 : vector<16xf32> to vector<16x1xf32>
    %21 = math.log %20 : vector<16x1xf32>
    %22 = arith.subf %17, %9 : vector<16x32xf32>
    %23 = arith.mulf %18, %22 : vector<16x32xf32>
    %cst_8 = arith.constant dense<0.000000e+00> : vector<16xf32>
    %24 = vector.multi_reduction <add>, %23, %cst_8 [1] : vector<16x32xf32> to vector<16xf32>
    %25 = vector.shape_cast %24 : vector<16xf32> to vector<16x1xf32>
    %26 = arith.divf %25, %20 : vector<16x1xf32>
    %27 = arith.subf %21, %13 : vector<16x1xf32>
    %28 = arith.subf %26, %27 : vector<16x1xf32>
    %c16_i32 = arith.constant 16 : i32
    %29 = arith.muli %arg0, %c16_i32 : i32
    %30 = tpu.iota {dimensions = array<i32: 0>} : vector<16x1xi32>
    %31 = vector.broadcast %29 : i32 to vector<16x1xi32>
    %32 = arith.addi %31, %30 : vector<16x1xi32>
    %c12_i32 = arith.constant 12 : i32
    %33 = vector.broadcast %c12_i32 : i32 to vector<16x1xi32>
    %34 = arith.cmpi slt, %32, %33 : vector<16x1xi32>
    %cst_9 = arith.constant 0.000000e+00 : f32
    %35 = vector.broadcast %cst_9 : f32 to vector<16x1xf32>
    %36 = arith.select %34, %28, %35 : vector<16x1xi1>, vector<16x1xf32>
    %37 = vector.shape_cast %36 : vector<16x1xf32> to vector<1x16x1xf32>
    %cst_10 = arith.constant dense<0.000000e+00> : vector<1xf32>
    %38 = vector.multi_reduction <add>, %37, %cst_10 [1, 2] : vector<1x16x1xf32> to vector<1xf32>
    %39 = vector.shape_cast %38 : vector<1xf32> to vector<1x1x1xf32>
    %40 = vector.extract %39[0, 0, 0] : f32 from vector<1x1x1xf32>
    %cst_11 = arith.constant 1.33333337 : f32
    %41 = arith.mulf %40, %cst_11 : f32
    %42 = vector.broadcast %41 : f32 to vector<1x8x128xf32>
    %c0_12 = arith.constant 0 : index
    %c0_13 = arith.constant 0 : index
    %c0_14 = arith.constant 0 : index
    %43 = vector.load %arg3[%c0_12, %c0_13, %c0_14] : memref<1x8x128xf32, #tpu.memory_space<vmem>>, vector<1x8x128xf32>
    tpu.vector_store %arg3[%c0_12, %c0_13, %c0_14], %42 {strides = array<i32>} : memref<1x8x128xf32, #tpu.memory_space<vmem>>, vector<1x8x128xf32>,
    return
  }
  func.func @transform_0(%arg0: i32) -> (i32, i32) {
    %c0_i32 = arith.constant 0 : i32
    %c0_i32_0 = arith.constant 0 : i32
    return %arg0, %c0_i32 : i32, i32
  }
  func.func @transform_1(%arg0: i32) -> (i32, i32) {
    %c0_i32 = arith.constant 0 : i32
    %c0_i32_0 = arith.constant 0 : i32
    return %arg0, %c0_i32 : i32, i32
  }
  func.func @transform_2(%arg0: i32) -> (i32, i32, i32) {
    %c0_i32 = arith.constant 0 : i32
    %c0_i32_0 = arith.constant 0 : i32
    %c0_i32_1 = arith.constant 0 : i32
    return %arg0, %c0_i32, %c0_i32_0 : i32, i32, i32
  }
}

</mosaic_0001>

<llo_original>
// kernel: tpu_custom_call.1
$region0: #{tpu_custom_call.1}
  #allocation0 [shape = 'u32[]', space=smem, size = 0x4, offset = 0x4, fixed_abs, tag = 'smem constant byte address 0x4 - core index']
  #allocation1 [shape = 'u32[144,128]{1,0:T(1,128)}', space=vmem, size = 0x12000, scoped, tag = 'internal scratch']
  %s0 = inlined_call_operand.hbm [shape: f32[12,32], index: 0, kind: input, shape index: {}]
  %s1 = inlined_call_operand.hbm [shape: f32[12,32], index: 1, kind: input, shape index: {}]
  %s2 = inlined_call_operand.hbm [shape: f32[1,8,128], index: 2, kind: output, shape index: {}]
  %s3 = sld [smem:[#allocation0]]
  $region26: #{tpu_custom_call.1} parent=0
    _
  %s5 = ssub.s32 1, %s3
  %s6 = scalar_select 0, %s5, %s3
  $region1: #{tpu_custom_call.1} parent=0
    #allocation2 [shape = 'u8[8192]{0}', space=vmem, size = 0x2000, scoped, tag = 'input window, operand 0, single buffered']
    #allocation3 [shape = 's32[1]{0}', space=sflag, size = 0x4, scoped, tag = 'scoped memory for tpu_custom_call.1']
    #allocation4 [shape = 's32[1]{0}', space=sflag, size = 0x4, scoped, tag = 'scoped memory for tpu_custom_call.1']
    #allocation5 [shape = 'u8[8192]{0}', space=vmem, size = 0x2000, scoped, tag = 'input window, operand 1, single buffered']
    #allocation6 [shape = 's32[1]{0}', space=sflag, size = 0x4, scoped, tag = 'scoped memory for tpu_custom_call.1']
    #allocation7 [shape = 'u8[4096]{0}', space=vmem, size = 0x1000, scoped, tag = 'output window, operand 0, single buffered']
    %7 = vsyncpa [#allocation3], 0
    %8 = vsyncpa [#allocation6], 0
    %9 = vsyncpa [#allocation4], 0
    // Predicated region
    $region2: #{tpu_custom_call.1} parent=1 // pred_check
      _
    $region3: #{tpu_custom_call.1} parent=1 // pred_check_branch
      %11 = sbr.rel (0) target = $region5
    $region4: #{tpu_custom_call.1} parent=1 // pred_region
      %s13 = ssub.s32 256, 256
      %14 = vsyncadd [#allocation3], %s13
      %s15 = sshll.u32 [#allocation2], 4
      %s16 = int_to_ptr.vmem [resolvable:$true] %s15
      %21 = dma.hbm_to_vmem [thread:$0]  %s0, 256, %s16, [#allocation3], 128, 128, 8
    $region5: #{tpu_custom_call.1} parent=1 // pred_fallthru
      _
    // Predicated region
    $region6: #{tpu_custom_call.1} parent=1 // pred_check
      _
    $region7: #{tpu_custom_call.1} parent=1 // pred_check_branch
      %23 = sbr.rel (0) target = $region9
    $region8: #{tpu_custom_call.1} parent=1 // pred_region
      %s25 = ssub.s32 256, 256
      %26 = vsyncadd [#allocation6], %s25
      %s27 = sshll.u32 [#allocation5], 4
      %s28 = int_to_ptr.vmem [resolvable:$true] %s27
      %33 = dma.hbm_to_vmem [thread:$0]  %s1, 256, %s28, [#allocation6], 128, 128, 8
    $region9: #{tpu_custom_call.1} parent=1 // pred_fallthru
      _
    // Predicated region
    $region10: #{tpu_custom_call.1} parent=1 // pred_check
      _
    $region11: #{tpu_custom_call.1} parent=1 // pred_check_branch
      %35 = sbr.rel (0) target = $region13
    $region12: #{tpu_custom_call.1} parent=1 // pred_region
      %36 = dma.done [#allocation3], 256
    $region13: #{tpu_custom_call.1} parent=1 // pred_fallthru
      _
    // Predicated region
    $region14: #{tpu_custom_call.1} parent=1 // pred_check
      _
    $region15: #{tpu_custom_call.1} parent=1 // pred_check_branch
      %38 = sbr.rel (0) target = $region17
    $region16: #{tpu_custom_call.1} parent=1 // pred_region
      %39 = dma.done [#allocation6], 256
    $region17: #{tpu_custom_call.1} parent=1 // pred_fallthru
      _
    %v40 = vld [vmem:[#allocation2] sm:$0xff]
    %v41 = vld [vmem:[#allocation2 + $0x8] sm:$0xff]
    %v42 = vmul.f32 %v40, 0.25
    %v43 = vmul.f32 %v41, 0.25
    %v44 = vld [vmem:[#allocation5] sm:$0xff]
    %v45 = vld [vmem:[#allocation5 + $0x8] sm:$0xff]
    %v46 = vmul.f32 %v44, 0.25
    %v47 = vmul.f32 %v45, 0.25
    %vm48 = vcmask 261120
    %v49 = vsel %vm48, %v42, -inf
    %50 = vmax.xlane.f32.xlu0 %v49
    %v51 = vpop.xlane.xlu0 %50
    %v52 = vsel %vm48, %v43, -inf
    %53 = vmax.xlane.f32.xlu0 %v52
    %v54 = vpop.xlane.xlu0 %53
    %v55 = vsub.f32 %v42, %v51
    %v56 = vsub.f32 %v43, %v54
    %v57 = vmul.f32 %v55, 1.442695
    %v58 = vpow.pop %v57
    %v59 = vmul.f32 %v56, 1.442695
    %v60 = vpow.pop %v59
    %v61 = vsel %vm48, %v58, 0.0
    %62 = vadd.xlane.f32.xlu0 %v61
    %v63 = vpop.xlane.xlu0 %62
    %v64 = vsel %vm48, %v60, 0.0
    %65 = vadd.xlane.f32.xlu0 %v64
    %v66 = vpop.xlane.xlu0 %65
    %v67 = vlog2.pop %v63
    %v68 = vmul.f32 %v67, 0.6931472
    %v69 = vlog2.pop %v66
    %v70 = vmul.f32 %v69, 0.6931472
    %v71 = vsel %vm48, %v46, -inf
    %72 = vmax.xlane.f32.xlu0 %v71
    %v73 = vpop.xlane.xlu0 %72
    %v74 = vsel %vm48, %v47, -inf
    %75 = vmax.xlane.f32.xlu0 %v74
    %v76 = vpop.xlane.xlu0 %75
    %v77 = vsub.f32 %v46, %v73
    %v78 = vsub.f32 %v47, %v76
    %v79 = vmul.f32 %v77, 1.442695
    %v80 = vpow.pop %v79
    %v81 = vmul.f32 %v78, 1.442695
    %v82 = vpow.pop %v81
    %v83 = vsel %vm48, %v80, 0.0
    %84 = vadd.xlane.f32.xlu0 %v83
    %v85 = vpop.xlane.xlu0 %84
    %v86 = vsel %vm48, %v82, 0.0
    %87 = vadd.xlane.f32.xlu0 %v86
    %v88 = vpop.xlane.xlu0 %87
    %v89 = vlog2.pop %v85
    %v90 = vmul.f32 %v89, 0.6931472
    %v91 = vlog2.pop %v88
    %v92 = vmul.f32 %v91, 0.6931472
    %v93 = vsub.f32 %v77, %v55
    %v94 = vsub.f32 %v78, %v56
    %v95 = vmul.f32 %v80, %v93
    %v96 = vmul.f32 %v82, %v94
    %v97 = vsel %vm48, %v95, 0.0
    %98 = vadd.xlane.f32.xlu0 %v97
    %v99 = vpop.xlane.xlu0 %98
    %v100 = vsel %vm48, %v96, 0.0
    %101 = vadd.xlane.f32.xlu0 %v100
    %v102 = vpop.xlane.xlu0 %101
    %v103 = vrcp.pop %v85
    %v104 = vmul.f32 %v99, %v103
    %v105 = vrcp.pop %v88
    %v106 = vmul.f32 %v102, %v105
    %v107 = vsub.f32 %v90, %v68
    %v108 = vsub.f32 %v92, %v70
    %v109 = vsub.f32 %v104, %v107
    %v110 = vsub.f32 %v106, %v108
    %s111 = smul.u32 0, 16
    %v112 = vlaneseq
    %v113 = vshrl.u32 %v112, 7
    %v114 = vadd.s32 %v113, 8
    %v115 = vstv %s111
    %v116 = vadd.s32 %v115, %v113
    %v117 = vadd.s32 %v115, %v114
    %vm118 = vcmp.lt.s32.totalorder %v116, 12
    %vm119 = vcmp.lt.s32.totalorder %v117, 12
    %v120 = vsel %vm118, %v109, 0.0
    %v121 = vsel %vm119, %v110, 0.0
    %vm122 = vcmask 7168
    %v123 = vsel %vm122, %v120, 0.0
    %v124 = vsel %vm122, %v121, 0.0
    %v125 = vadd.f32 %v123, %v124
    %126 = vadd.xlane.f32.xlu0 %v125
    %v127 = vpop.xlane.xlu0 %126
    %v128 = vrot.slane %v127, 4
    %v129 = vadd.f32 %v127, %v128
    %v130 = vrot.slane %v129, 2
    %v131 = vadd.f32 %v129, %v130
    %v132 = vrot.slane %v131, 1
    %v133 = vadd.f32 %v131, %v132
    %s134 = vtos %v133
    %s135 = smul.f32 %s134, 1.3333334
    %v136 = vstv %s135
    %137 = vst [vmem:[#allocation7] sm:$0xff] %v136
    // Predicated region
    $region18: #{tpu_custom_call.1} parent=1 // pred_check
      _
    $region19: #{tpu_custom_call.1} parent=1 // pred_check_branch
      %139 = sbr.rel (0) target = $region21
    $region20: #{tpu_custom_call.1} parent=1 // pred_region
      %s141 = ssub.s32 128, 128
      %142 = vsyncadd [#allocation4], %s141
      %s144 = sshll.u32 [#allocation7], 4
      %s145 = int_to_ptr.vmem [resolvable:$true] %s144
      %147 = dma.vmem_to_hbm [thread:$0]  %s145, 128, %s2, [#allocation4]
    $region21: #{tpu_custom_call.1} parent=1 // pred_fallthru
      _
    // Predicated region
    $region22: #{tpu_custom_call.1} parent=1 // pred_check
      _
    $region23: #{tpu_custom_call.1} parent=1 // pred_check_branch
      %149 = sbr.rel (0) target = $region25
    $region24: #{tpu_custom_call.1} parent=1 // pred_region
      %150 = dma.done [#allocation4], 128
    $region25: #{tpu_custom_call.1} parent=1 // pred_fallthru
      _
    %151 = vsyncpa [#allocation3], 1
    %152 = vsyncpa [#allocation6], 1
    %153 = vsyncpa [#allocation4], 1

</llo_original>
